<compile_context>
chip_gen: v7x
topology: tpu7x:2x2x1
jax: 0.10.0
libtpu: 0.0.40
codegen_flags: <defaults>
</compile_context>

<pallas_src>
import jax
import jax.numpy as jnp
from jax.experimental import pallas as pl
from jax.experimental.pallas import tpu as pltpu


def _sinlu_kernel(a_ref, b_ref, x_ref, o_ref):
    # a_ref, b_ref: SMEM scalars of shape (1,), kept in f32.
    a = a_ref[0]
    b = b_ref[0]
    x = x_ref[...].astype(jnp.float32)           # upcast once per tile (no-op for f32)
    # sigmoid(x) == 0.5 * (tanh(0.5 x) + 1): single EUP transcendental.
    sig = 0.5 * (jnp.tanh(0.5 * x) + 1.0)
    y = sig * (x + a * jnp.sin(b * x))
    o_ref[...] = y.astype(o_ref.dtype)


# Layout / tiling knobs.
_LANE_WIDTHS = (2048, 1024, 512, 256, 128)   # widest lane dim that divides n
_TARGET_TILE_BYTES = 3 * 1024 * 1024         # ~3 MiB/tile; 4x tiles = 12 MiB < v5e 16 MiB
_MULTISTEP_BYTES = 1 * 1024 * 1024           # force >=4 grid steps above this (v7x megacore)
_FLAT_BLOCK_ELEMS = 512 * 1024               # 1D unaligned fallback block (2 MiB f32)


def sinlu(x, a, b):
    """SinLU elementwise activation via Pallas. x: any shape/float dtype; a, b: (1,)."""
    orig_shape = x.shape
    dtype = x.dtype
    n = x.size
    itemsize = x.dtype.itemsize
    total_bytes = n * itemsize

    # Scalar params stay 32-bit in SMEM (no bf16 downcast of the parameters).
    a32 = a.astype(jnp.float32).reshape((1,))
    b32 = b.astype(jnp.float32).reshape((1,))
    smem = pl.BlockSpec(memory_space=pltpu.MemorySpace.SMEM)

    x_flat = x.reshape(-1)
    width = next((w for w in _LANE_WIDTHS if n % w == 0), None)

    if width is not None:
        # Lane-aligned: lane-dense (rows, width) slab, no data movement (reshape
        # of a contiguous array is free layout plumbing).
        rows = n // width
        x_in = x_flat.reshape(rows, width)

        # ~3 MiB tiles, but for inputs > 1 MiB force >= 4 grid steps so both
        # TensorCores are used on v7x (dimension_semantics = parallel).
        block_rows = max(8, _TARGET_TILE_BYTES // (width * itemsize))
        if total_bytes > _MULTISTEP_BYTES:
            block_rows = min(block_rows, max(8, pl.cdiv(rows, 4)))
        block_rows = min(block_rows, rows)
        if block_rows != rows:
            block_rows = max(8, (block_rows // 8) * 8)   # sublane-aligned tiles

        grid = (pl.cdiv(rows, block_rows),)
        blk = (block_rows, width)
        idx = lambda i: (i, 0)
        out_shape = jax.ShapeDtypeStruct((rows, width), dtype)
    else:
        # n not a multiple of 128: keep the flat 1D layout and let Pallas clip /
        # mask the ragged last block (no pad or slice HBM round-trips).
        if n <= _FLAT_BLOCK_ELEMS:
            blk = (n,)                         # full-array block: always legal
            grid = (1,)
        else:
            blk = (_FLAT_BLOCK_ELEMS,)         # multiple of 128; tail is clipped
            grid = (pl.cdiv(n, _FLAT_BLOCK_ELEMS),)
        idx = lambda i: (i,)
        x_in = x_flat
        out_shape = jax.ShapeDtypeStruct((n,), dtype)

    out = pl.pallas_call(
        _sinlu_kernel,
        out_shape=out_shape,
        grid_spec=pl.GridSpec(
            grid=grid,
            in_specs=[smem, smem, pl.BlockSpec(blk, idx)],
            out_specs=pl.BlockSpec(blk, idx),
        ),
        compiler_params=pltpu.CompilerParams(
            dimension_semantics=("parallel",)),   # shards grid steps across 2 TCs on v7x
    )(a32, b32, x_in)

    return out.reshape(orig_shape)


if __name__ == "__main__":
    key = jax.random.PRNGKey(0)
    k_main, k_big, k_unaligned, k_bf16 = jax.random.split(key, 4)

    # Deterministic parameter init, matching nn.init.constant_(_, 1.0)
    a = jnp.ones((1,), dtype=jnp.float32)
    b = jnp.ones((1,), dtype=jnp.float32)

    def ref_fn(x):
        xf = x.astype(jnp.float32)
        return (jax.nn.sigmoid(xf) * (xf + a[0] * jnp.sin(b[0] * xf))).astype(x.dtype)

    # 1) Primary: NCHW feature map, f32, lane-aligned (single full-slab block).
    x = jax.random.normal(k_main, (2, 4, 16, 16), dtype=jnp.float32)
    out = jax.block_until_ready(sinlu(x, a, b))
    assert out.shape == x.shape
    assert jnp.allclose(out, ref_fn(x), atol=1e-5, rtol=1e-5), "mismatch (f32 aligned)"

    # 2) Larger aligned input (2 MiB): exercises the multi-step tiled grid path.
    x_big = jax.random.normal(k_big, (256, 2048), dtype=jnp.float32)
    out_big = jax.block_until_ready(sinlu(x_big, a, b))
    assert jnp.allclose(out_big, ref_fn(x_big), atol=1e-5, rtol=1e-5), "mismatch (f32 big)"

    # 3) Non-lane-aligned size: flat ragged path, no pad/slice round-trips.
    x_u = jax.random.normal(k_unaligned, (1000,), dtype=jnp.float32)
    out_u = jax.block_until_ready(sinlu(x_u, a, b))
    assert jnp.allclose(out_u, ref_fn(x_u), atol=1e-5, rtol=1e-5), "mismatch (unaligned)"

    # 4) bf16 input: halved HBM traffic, f32 math inside the kernel.
    x_bf = jax.random.normal(k_bf16, (2, 4, 16, 16), dtype=jnp.bfloat16)
    out_bf = jax.block_until_ready(sinlu(x_bf, a, b))
    assert out_bf.dtype == jnp.bfloat16
    assert jnp.allclose(out_bf.astype(jnp.float32), ref_fn(x_bf).astype(jnp.float32),
                        atol=2e-2, rtol=2e-2), "mismatch (bf16)"

    print("KERNEL_OK")
</pallas_src>

<mosaic_0001>
module attributes {stable_mosaic.version = 11 : i64} {
  func.func @_sinlu_kernel(%arg0: i32, %arg1: memref<1xf32, #tpu.memory_space<smem>>, %arg2: memref<1xf32, #tpu.memory_space<smem>>, %arg3: memref<1x2048xf32, #tpu.memory_space<vmem>>, %arg4: memref<1x2048xf32, #tpu.memory_space<vmem>>) attributes {dimension_semantics = [#tpu.dimension_semantics<parallel>], iteration_bounds = array<i64: 1>, scalar_prefetch = 0 : i64, scratch_operands = 0 : i64, tpu.core_type = #tpu.core_type<tc>, window_params = [{transform_indices = @transform_0, window_bounds = array<i64: 1>}, {transform_indices = @transform_1, window_bounds = array<i64: 1>}, {transform_indices = @transform_2, window_bounds = array<i64: 1, 2048>}, {transform_indices = @transform_3, window_bounds = array<i64: 1, 2048>}]} {
    %c0 = arith.constant 0 : index
    %0 = memref.load %arg1[%c0] : memref<1xf32, #tpu.memory_space<smem>>
    %c0_0 = arith.constant 0 : index
    %1 = memref.load %arg2[%c0_0] : memref<1xf32, #tpu.memory_space<smem>>
    %c0_1 = arith.constant 0 : index
    %c0_2 = arith.constant 0 : index
    %2 = vector.load %arg3[%c0_1, %c0_2] : memref<1x2048xf32, #tpu.memory_space<vmem>>, vector<1x2048xf32>
    %cst = arith.constant 5.000000e-01 : f32
    %3 = vector.broadcast %cst : f32 to vector<1x2048xf32>
    %4 = arith.mulf %3, %2 : vector<1x2048xf32>
    %5 = math.tanh %4 : vector<1x2048xf32>
    %cst_3 = arith.constant 1.000000e+00 : f32
    %6 = vector.broadcast %cst_3 : f32 to vector<1x2048xf32>
    %7 = arith.addf %5, %6 : vector<1x2048xf32>
    %cst_4 = arith.constant 5.000000e-01 : f32
    %8 = vector.broadcast %cst_4 : f32 to vector<1x2048xf32>
    %9 = arith.mulf %8, %7 : vector<1x2048xf32>
    %10 = vector.broadcast %1 : f32 to vector<1x2048xf32>
    %11 = arith.mulf %10, %2 : vector<1x2048xf32>
    %12 = math.sin %11 : vector<1x2048xf32>
    %13 = vector.broadcast %0 : f32 to vector<1x2048xf32>
    %14 = arith.mulf %13, %12 : vector<1x2048xf32>
    %15 = arith.addf %2, %14 : vector<1x2048xf32>
    %16 = arith.mulf %9, %15 : vector<1x2048xf32>
    %c0_5 = arith.constant 0 : index
    %c0_6 = arith.constant 0 : index
    %17 = vector.load %arg4[%c0_5, %c0_6] : memref<1x2048xf32, #tpu.memory_space<vmem>>, vector<1x2048xf32>
    tpu.vector_store %arg4[%c0_5, %c0_6], %16 {strides = array<i32>} : memref<1x2048xf32, #tpu.memory_space<vmem>>, vector<1x2048xf32>,
    return
  }
  func.func @transform_0(%arg0: i32) -> i32 {
    %c0_i32 = arith.constant 0 : i32
    %c0_i32_0 = arith.constant 0 : i32
    return %c0_i32 : i32
  }
  func.func @transform_1(%arg0: i32) -> i32 {
    %c0_i32 = arith.constant 0 : i32
    %c0_i32_0 = arith.constant 0 : i32
    return %c0_i32 : i32
  }
  func.func @transform_2(%arg0: i32) -> (i32, i32) {
    %c0_i32 = arith.constant 0 : i32
    %c0_i32_0 = arith.constant 0 : i32
    return %arg0, %c0_i32 : i32, i32
  }
  func.func @transform_3(%arg0: i32) -> (i32, i32) {
    %c0_i32 = arith.constant 0 : i32
    %c0_i32_0 = arith.constant 0 : i32
    return %arg0, %c0_i32 : i32, i32
  }
}

</mosaic_0001>

<llo_original>
// kernel: tpu_custom_call.1
$region0: #{tpu_custom_call.1}
  #allocation0 [shape = 'u32[]', space=smem, size = 0x4, offset = 0x4, fixed_abs, tag = 'smem constant byte address 0x4 - core index']
  #allocation1 [shape = 'u32[144,128]{1,0:T(1,128)}', space=vmem, size = 0x12000, scoped, tag = 'internal scratch']
  #allocation2 [shape = 'f32[1]{0:T(128)S(6)}', space=smem, size = 0x200, scoped, tag = 'scoped memory for tpu_custom_call.1']
  #allocation3 [shape = 'f32[1]{0:T(128)S(6)}', space=smem, size = 0x200, scoped, tag = 'scoped memory for tpu_custom_call.1']
  %s0 = inlined_call_operand.<no memory space> [shape: f32[1], index: 0, kind: input, shape index: {}]
  %s1 = inlined_call_operand.<no memory space> [shape: f32[1], index: 1, kind: input, shape index: {}]
  %s2 = inlined_call_operand.hbm [shape: f32[1,2048], index: 2, kind: input, shape index: {}]
  %s3 = inlined_call_operand.hbm [shape: f32[1,2048], index: 3, kind: output, shape index: {}]
  %s4 = sld [smem:[#allocation0]]
  $region26: #{tpu_custom_call.1} parent=0
    _
  %s6 = ssub.s32 1, %s4
  %s7 = scalar_select 0, %s6, %s4
  %8 = sst [smem:[#allocation2]] %s0
  %9 = sst [smem:[#allocation3]] %s1
  $region1: #{tpu_custom_call.1} parent=0
    #allocation4 [shape = 'u8[8192]{0}', space=vmem, size = 0x2000, scoped, tag = 'input window, operand 2, single buffered']
    #allocation5 [shape = 's32[1]{0}', space=sflag, size = 0x4, scoped, tag = 'scoped memory for tpu_custom_call.1']
    #allocation6 [shape = 's32[1]{0}', space=sflag, size = 0x4, scoped, tag = 'scoped memory for tpu_custom_call.1']
    #allocation7 [shape = 'u8[8192]{0}', space=vmem, size = 0x2000, scoped, tag = 'output window, operand 0, single buffered']
    %10 = vsyncpa [#allocation5], 0
    %11 = vsyncpa [#allocation6], 0
    // Predicated region
    $region2: #{tpu_custom_call.1} parent=1 // pred_check
      _
    $region3: #{tpu_custom_call.1} parent=1 // pred_check_branch
      %13 = sbr.rel (0) target = $region5
    $region4: #{tpu_custom_call.1} parent=1 // pred_region
      _
    $region5: #{tpu_custom_call.1} parent=1 // pred_fallthru
      _
    // Predicated region
    $region6: #{tpu_custom_call.1} parent=1 // pred_check
      _
    $region7: #{tpu_custom_call.1} parent=1 // pred_check_branch
      %15 = sbr.rel (0) target = $region9
    $region8: #{tpu_custom_call.1} parent=1 // pred_region
      _
    $region9: #{tpu_custom_call.1} parent=1 // pred_fallthru
      _
    // Predicated region
    $region10: #{tpu_custom_call.1} parent=1 // pred_check
      _
    $region11: #{tpu_custom_call.1} parent=1 // pred_check_branch
      %17 = sbr.rel (0) target = $region13
    $region12: #{tpu_custom_call.1} parent=1 // pred_region
      %s19 = ssub.s32 256, 256
      %20 = vsyncadd [#allocation5], %s19
      %s22 = sshll.u32 [#allocation4], 4
      %s23 = int_to_ptr.vmem [resolvable:$true] %s22
      %25 = dma.hbm_to_vmem [thread:$0]  %s2, 256, %s23, [#allocation5]
    $region13: #{tpu_custom_call.1} parent=1 // pred_fallthru
      _
    // Predicated region
    $region14: #{tpu_custom_call.1} parent=1 // pred_check
      _
    $region15: #{tpu_custom_call.1} parent=1 // pred_check_branch
      %27 = sbr.rel (0) target = $region17
    $region16: #{tpu_custom_call.1} parent=1 // pred_region
      %28 = dma.done [#allocation5], 256
    $region17: #{tpu_custom_call.1} parent=1 // pred_fallthru
      _
    %s29 = sld [smem:[#allocation2]]
    %s30 = sld [smem:[#allocation3]]
    %v31 = vld [vmem:[#allocation4] sm:$0xff]
    %v32 = vld [vmem:[#allocation4 + $0x8] sm:$0xff]
    %v33 = vmul.f32 %v31, 0.5
    %v34 = vmul.f32 %v32, 0.5
    %v35 = vtanh.pop %v33
    %v36 = vtanh.pop %v34
    %v37 = vadd.f32 %v35, 1.0
    %v38 = vadd.f32 %v36, 1.0
    %v39 = vmul.f32 %v37, 0.5
    %v40 = vmul.f32 %v38, 0.5
    %v41 = vstv %s30
    %v42 = vmul.f32 %v41, %v31
    %v43 = vmul.f32 %v41, %v32
    %v44 = vand.u32 2147483647, %v42
    %vm45 = vcmp.le.f32.partialorder %v44, 0.7853982
    %vm46 = vcmp.lt.s32.totalorder %v42, 0
    %v47 = vand.u32 %v42, 2139095040
    %v48 = vshrl.u32 %v47, 23
    %v49 = vsub.s32 %v48, 127
    %v50 = vand.u32 2147483647, %v42
    %v51 = vand.u32 %v50, 8388607
    %v52 = vor.u32 %v51, 8388608
    %v53 = vsub.s32 0, %v52
    %v54 = vadd.s32 %v49, 1
    %vm55 = vcmp.gt.s32.totalorder %v54, 0
    %v56 = vsel %vm55, %v54, 0
    %v57 = vshrl.u32 %v56, 5
    %v58 = vand.u32 %v56, 31
    %v59 = vsub.s32 32, %v58
    %v60 = vshrl.u32 683565275, %v59
    %v61 = vshll.u32 683565275, %v58
    %v62 = vshrl.u32 2475754826, %v59
    %v63 = vor.u32 %v61, %v62
    %v64 = vshll.u32 2475754826, %v58
    %v65 = vshrl.u32 2131351028, %v59
    %v66 = vor.u32 %v64, %v65
    %v67 = vshll.u32 2131351028, %v58
    %v68 = vshrl.u32 2102212464, %v59
    %v69 = vor.u32 %v67, %v68
    %v70 = vshll.u32 2102212464, %v58
    %v71 = vshrl.u32 920167782, %v59
    %v72 = vor.u32 %v70, %v71
    %v73 = vshll.u32 920167782, %v58
    %v74 = vshrl.u32 1326507024, %v59
    %v75 = vor.u32 %v73, %v74
    %vm76 = vcmp.lt.s32.totalorder %v57, 1
    %vm77 = vcmp.lt.s32.totalorder %v57, 2
    %vm78 = vcmp.lt.s32.totalorder %v57, 3
    %vm79 = vcmp.lt.s32.totalorder %v57, 4
    %v80 = vsel %vm76, %v60, %v63
    %v81 = vsel %vm79, %v69, 2102212464
    %v82 = vsel %vm78, %v66, %v81
    %v83 = vsel %vm77, %v80, %v82
    %v84 = vsel %vm76, %v63, %v66
    %v85 = vsel %vm79, %v72, 920167782
    %v86 = vsel %vm78, %v69, %v85
    %v87 = vsel %vm77, %v84, %v86
    %v88 = vsel %vm76, %v66, %v69
    %v89 = vsel %vm79, %v75, 1326507024
    %v90 = vsel %vm78, %v72, %v89
    %v91 = vsel %vm77, %v88, %v90
    %v92 = vshll.u32 %v52, 8
    %v93 = vmul.u32.u64.compose %v92, %v91
    %v94 = vextract.low.u32 %v93
    %v95 = vextract.high.u32 %v93
    %v96 = vmul.u32.u64.compose %v92, %v87
    %v97 = vextract.low.u32 %v96
    %v98 = vextract.high.u32 %v96
    %v99 = vmul.u32 %v92, %v83
    %v100 = vadd.s32 %v95, %v97
    %vm101 = vc.u32 %v95, %v97
    %v102 = vadd.s32 %v98, 1
    %v103 = vsel %vm101, %v102, %v98
    %v104 = vadd.s32 %v99, %v103
    %v105 = vadd.s32 %v104, 536870912
    %v106 = vshrl.u32 %v105, 30
    %v107 = vshll.u32 %v106, 30
    %v108 = vsub.s32 %v104, %v107
    %vm109 = vcmp.lt.s32.totalorder %v108, 0
    %v110 = vsub.s32 0, %v108
    %v111 = vsel %vm109, %v110, %v108
    %v112 = vclz %v111
    %v113 = vsub.s32 %v112, 2
    %vm114 = vcmp.gt.s32.totalorder 0, %v113
    %v115 = vsel %vm114, 0, %v113
    %v116 = vsub.s32 32, %v115
    %v117 = vshll.u32 %v108, %v115
    %v118 = vshrl.u32 %v100, %v116
    %v119 = vor.u32 %v117, %v118
    %v120 = vsub.s32 4294967266, %v115
    %v121 = vadd.s32 %v120, 127
    %v122 = vshll.u32 %v121, 23
    %v123 = vor.u32 4788187, %v122
    %v124 = vand.u32 2147483647, %v123
    %v126 = vcvt.s32.f32 %v119
    %v127 = vmul.f32 %v126, %v124
    %v128 = vxor.u32 %v127, 2147483648
    %v129 = vsel %vm46, %v128, %v127
    %v130 = vsub.s32 4, %v106
    %v131 = vsel %vm46, %v130, %v106
    %v132 = vsel %vm45, %v42, %v129
    %v133 = vsel %vm45, 0, %v131
    %v134 = vcosq.f32.pop %v132
    %v135 = vsinq.f32.pop %v132
    %vm136 = vweird.f32 %v42
    %v137 = vadd.s32 %v133, 3
    %v138 = vand.u32 %v137, 3
    %vm139 = vcmp.lt.s32.totalorder %v138, 2
    %vm140 = vcmp.eq.s32.totalorder %v138, 0
    %v141 = vxor.u32 %v135, 2147483648
    %v142 = vsel %vm140, %v134, %v141
    %vm143 = vcmp.eq.s32.totalorder %v138, 2
    %v144 = vxor.u32 %v134, 2147483648
    %v145 = vsel %vm143, %v144, %v135
    %v146 = vsel %vm139, %v142, %v145
    %v147 = vsel %vm136, nan, %v146
    %v148 = vand.u32 2147483647, %v43
    %vm149 = vcmp.le.f32.partialorder %v148, 0.7853982
    %vm150 = vcmp.lt.s32.totalorder %v43, 0
    %v151 = vand.u32 %v43, 2139095040
    %v152 = vshrl.u32 %v151, 23
    %v153 = vsub.s32 %v152, 127
    %v154 = vand.u32 2147483647, %v43
    %v155 = vand.u32 %v154, 8388607
    %v156 = vor.u32 %v155, 8388608
    %v157 = vsub.s32 0, %v156
    %v158 = vadd.s32 %v153, 1
    %vm159 = vcmp.gt.s32.totalorder %v158, 0
    %v160 = vsel %vm159, %v158, 0
    %v161 = vshrl.u32 %v160, 5
    %v162 = vand.u32 %v160, 31
    %v163 = vsub.s32 32, %v162
    %v164 = vshrl.u32 683565275, %v163
    %v165 = vshll.u32 683565275, %v162
    %v166 = vshrl.u32 2475754826, %v163
    %v167 = vor.u32 %v165, %v166
    %v168 = vshll.u32 2475754826, %v162
    %v169 = vshrl.u32 2131351028, %v163
    %v170 = vor.u32 %v168, %v169
    %v171 = vshll.u32 2131351028, %v162
    %v172 = vshrl.u32 2102212464, %v163
    %v173 = vor.u32 %v171, %v172
    %v174 = vshll.u32 2102212464, %v162
    %v175 = vshrl.u32 920167782, %v163
    %v176 = vor.u32 %v174, %v175
    %v177 = vshll.u32 920167782, %v162
    %v178 = vshrl.u32 1326507024, %v163
    %v179 = vor.u32 %v177, %v178
    %vm180 = vcmp.lt.s32.totalorder %v161, 1
    %vm181 = vcmp.lt.s32.totalorder %v161, 2
    %vm182 = vcmp.lt.s32.totalorder %v161, 3
    %vm183 = vcmp.lt.s32.totalorder %v161, 4
    %v184 = vsel %vm180, %v164, %v167
    %v185 = vsel %vm183, %v173, 2102212464
    %v186 = vsel %vm182, %v170, %v185
    %v187 = vsel %vm181, %v184, %v186
    %v188 = vsel %vm180, %v167, %v170
    %v189 = vsel %vm183, %v176, 920167782
    %v190 = vsel %vm182, %v173, %v189
    %v191 = vsel %vm181, %v188, %v190
    %v192 = vsel %vm180, %v170, %v173
    %v193 = vsel %vm183, %v179, 1326507024
    %v194 = vsel %vm182, %v176, %v193
    %v195 = vsel %vm181, %v192, %v194
    %v196 = vshll.u32 %v156, 8
    %v197 = vmul.u32.u64.compose %v196, %v195
    %v198 = vextract.low.u32 %v197
    %v199 = vextract.high.u32 %v197
    %v200 = vmul.u32.u64.compose %v196, %v191
    %v201 = vextract.low.u32 %v200
    %v202 = vextract.high.u32 %v200
    %v203 = vmul.u32 %v196, %v187
    %v204 = vadd.s32 %v199, %v201
    %vm205 = vc.u32 %v199, %v201
    %v206 = vadd.s32 %v202, 1
    %v207 = vsel %vm205, %v206, %v202
    %v208 = vadd.s32 %v203, %v207
    %v209 = vadd.s32 %v208, 536870912
    %v210 = vshrl.u32 %v209, 30
    %v211 = vshll.u32 %v210, 30
    %v212 = vsub.s32 %v208, %v211
    %vm213 = vcmp.lt.s32.totalorder %v212, 0
    %v214 = vsub.s32 0, %v212
    %v215 = vsel %vm213, %v214, %v212
    %v216 = vclz %v215
    %v217 = vsub.s32 %v216, 2
    %vm218 = vcmp.gt.s32.totalorder 0, %v217
    %v219 = vsel %vm218, 0, %v217
    %v220 = vsub.s32 32, %v219
    %v221 = vshll.u32 %v212, %v219
    %v222 = vshrl.u32 %v204, %v220
    %v223 = vor.u32 %v221, %v222
    %v224 = vsub.s32 4294967266, %v219
    %v225 = vadd.s32 %v224, 127
    %v226 = vshll.u32 %v225, 23
    %v227 = vor.u32 4788187, %v226
    %v228 = vand.u32 2147483647, %v227
    %v230 = vcvt.s32.f32 %v223
    %v231 = vmul.f32 %v230, %v228
    %v232 = vxor.u32 %v231, 2147483648
    %v233 = vsel %vm150, %v232, %v231
    %v234 = vsub.s32 4, %v210
    %v235 = vsel %vm150, %v234, %v210
    %v236 = vsel %vm149, %v43, %v233
    %v237 = vsel %vm149, 0, %v235
    %v238 = vcosq.f32.pop %v236
    %v239 = vsinq.f32.pop %v236
    %vm240 = vweird.f32 %v43
    %v241 = vadd.s32 %v237, 3
    %v242 = vand.u32 %v241, 3
    %vm243 = vcmp.lt.s32.totalorder %v242, 2
    %vm244 = vcmp.eq.s32.totalorder %v242, 0
    %v245 = vxor.u32 %v239, 2147483648
    %v246 = vsel %vm244, %v238, %v245
    %vm247 = vcmp.eq.s32.totalorder %v242, 2
    %v248 = vxor.u32 %v238, 2147483648
    %v249 = vsel %vm247, %v248, %v239
    %v250 = vsel %vm243, %v246, %v249
    %v251 = vsel %vm240, nan, %v250
    %v252 = vstv %s29
    %v253 = vmul.f32 %v252, %v147
    %v254 = vmul.f32 %v252, %v251
    %v255 = vadd.f32 %v31, %v253
    %v256 = vadd.f32 %v32, %v254
    %v257 = vmul.f32 %v39, %v255
    %v258 = vmul.f32 %v40, %v256
    %259 = vst [vmem:[#allocation7] sm:$0xff] %v257
    %260 = vst [vmem:[#allocation7 + $0x8] sm:$0xff] %v258
    // Predicated region
    $region18: #{tpu_custom_call.1} parent=1 // pred_check
      _
    $region19: #{tpu_custom_call.1} parent=1 // pred_check_branch
      %262 = sbr.rel (0) target = $region21
    $region20: #{tpu_custom_call.1} parent=1 // pred_region
      %s264 = ssub.s32 256, 256
      %265 = vsyncadd [#allocation6], %s264
      %s267 = sshll.u32 [#allocation7], 4
      %s268 = int_to_ptr.vmem [resolvable:$true] %s267
      %270 = dma.vmem_to_hbm [thread:$0]  %s268, 256, %s3, [#allocation6]
    $region21: #{tpu_custom_call.1} parent=1 // pred_fallthru
      _
    // Predicated region
    $region22: #{tpu_custom_call.1} parent=1 // pred_check
      _
    $region23: #{tpu_custom_call.1} parent=1 // pred_check_branch
      %272 = sbr.rel (0) target = $region25
    $region24: #{tpu_custom_call.1} parent=1 // pred_region
      %273 = dma.done [#allocation6], 256
    $region25: #{tpu_custom_call.1} parent=1 // pred_fallthru
      _
    %274 = vsyncpa [#allocation5], 1
    %275 = vsyncpa [#allocation6], 1

</llo_original>
